<compile_context>
chip_gen: v7x
topology: tpu7x:2x2x1
jax: 0.10.0
libtpu: 0.0.40
codegen_flags: <defaults>
</compile_context>

<pallas_src>
import jax
import jax.numpy as jnp
from jax.experimental import pallas as pl
from jax.experimental.pallas import tpu as pltpu


# ---------------------------------------------------------------------------
# Kernel: one batch tile, batch on the lane axis.
#   x_ref : [F, TB]  (compute dtype)
#   w1T   : [H, F]  b1T : [H, 1] (f32)
#   w2T   : [H, H]  b2T : [H, 1] (f32)
#   w3T   : [O, H]  b3T : [O, 1] (f32)
#   y_ref : [O, TB] (f32)
# MXU operands in compute dtype (bf16 by default), accumulation/bias/tanh f32,
# h1/h2 materialized once in compute dtype to halve VMEM vst/vld traffic.
# ---------------------------------------------------------------------------
def torch_module_kernel(x_ref, w1_ref, b1_ref, w2_ref, b2_ref, w3_ref, b3_ref,
                        y_ref):
    cdt = w1_ref.dtype
    h1 = jnp.tanh(
        jnp.dot(w1_ref[...], x_ref[...], preferred_element_type=jnp.float32)
        + b1_ref[...]
    ).astype(cdt)                                                    # [H, TB]
    h2 = jnp.tanh(
        jnp.dot(w2_ref[...], h1, preferred_element_type=jnp.float32)
        + b2_ref[...]
    ).astype(cdt)                                                    # [H, TB]
    y = (
        jnp.dot(w3_ref[...], h2, preferred_element_type=jnp.float32)
        + b3_ref[...]
    )                                                                # [O, TB]
    y_ref[...] = y.astype(y_ref.dtype)


# ---------------------------------------------------------------------------
# Parameters
# ---------------------------------------------------------------------------
def make_params(n_features=4, hidden=32, n_outputs=2, seed=0):
    """Deterministic synthetic TorchModel parameters (no checkpoint load)."""
    keys = jax.random.split(jax.random.PRNGKey(seed), 8)
    f32 = jnp.float32
    return dict(
        in_off=jax.random.normal(keys[0], (1, n_features), f32) * 0.1,
        in_scale=1.0 + 0.05 * jax.random.normal(keys[1], (1, n_features), f32),
        w1=jax.random.normal(keys[2], (n_features, hidden), f32) / jnp.sqrt(n_features),
        b1=0.01 * jax.random.normal(keys[3], (1, hidden), f32),
        w2=jax.random.normal(keys[4], (hidden, hidden), f32) / jnp.sqrt(hidden),
        b2=0.01 * jax.random.normal(keys[5], (1, hidden), f32),
        w3=jax.random.normal(keys[6], (hidden, n_outputs), f32) / jnp.sqrt(hidden),
        b3=0.01 * jax.random.normal(keys[7], (1, n_outputs), f32),
        out_scale=jnp.full((1, n_outputs), 2.0, f32),
        out_off=jnp.full((1, n_outputs), 0.5, f32),
    )


def prepare_kernel_params(p, compute_dtype=jnp.bfloat16):
    """One-time fold of the affine transformers into W1/b1 and W3/b3,
    transposed so the kernel can keep batch on the lane axis.

    (x - off) * s @ W1 + b1 == x @ (W1 * s^T) + (b1 - (off * s) @ W1)
    (h @ W3 + b3) * os + oo == h @ (W3 * os)  + (b3 * os + oo)

    compute_dtype defaults to bf16 (MXU-native on v5e/v6e/v7x); pass
    jnp.float32 if bit-exact f32 evaluation is required.
    """
    w1f = p["w1"] * p["in_scale"].T                          # [F, H]
    b1f = p["b1"] - (p["in_off"] * p["in_scale"]) @ p["w1"]  # [1, H]
    w3f = p["w3"] * p["out_scale"]                           # [H, O]
    b3f = p["b3"] * p["out_scale"] + p["out_off"]            # [1, O]
    f32 = jnp.float32
    return dict(
        w1T=w1f.T.astype(compute_dtype),      # [H, F]
        b1T=b1f.T.astype(f32),                # [H, 1]
        w2T=p["w2"].T.astype(compute_dtype),  # [H, H]
        b2T=p["b2"].T.astype(f32),            # [H, 1]
        w3T=w3f.T.astype(compute_dtype),      # [O, H]
        b3T=b3f.T.astype(f32),                # [O, 1]
    )


# ---------------------------------------------------------------------------
# Feature-major core: xT is [F, B_pad] (compute dtype), B_pad % TB == 0.
# Returns yT [O, B_pad] f32. Callers that already hold feature-major data can
# use this directly and skip the wrapper transpose/pad passes entirely.
# ---------------------------------------------------------------------------
def torch_module_forward_feature_major(xT, kp, *, tb):
    hidden, n_features = kp["w1T"].shape
    n_outputs = kp["w3T"].shape[0]
    compute_dtype = kp["w1T"].dtype
    cb = jnp.dtype(compute_dtype).itemsize

    B_pad = xT.shape[1]
    TB = tb
    assert B_pad % TB == 0 and TB % 128 == 0
    grid = (B_pad // TB,)
    const = lambda i: (0, 0)  # weights / biases resident across grid steps

    # Advisory cost estimate so XLA overlaps surrounding layout ops.
    flops = 2 * B_pad * (n_features * hidden + hidden * hidden
                         + hidden * n_outputs)
    transcendentals = 2 * B_pad * hidden
    bytes_accessed = B_pad * (n_features * cb + n_outputs * 4) + 2048

    # VMEM working set (per grid step): double-buffered x/y tiles (sublane dim
    # padded to 8) + h1/h2 in compute dtype + f32 matmul/tanh temporaries.
    est_vmem = TB * (2 * 8 * cb + 2 * 8 * 4
                     + 2 * hidden * cb + 2 * hidden * 4)
    cp_kwargs = dict(dimension_semantics=("parallel",))  # v7x TC sharding
    if est_vmem > (12 << 20):   # only needed if user pushes tb past ~32K
        cp_kwargs["vmem_limit_bytes"] = int(min(2 * est_vmem, 64 << 20))

    return pl.pallas_call(
        torch_module_kernel,
        out_shape=jax.ShapeDtypeStruct((n_outputs, B_pad), jnp.float32),
        grid=grid,
        in_specs=[
            pl.BlockSpec((n_features, TB), lambda i: (0, i)),   # x tile
            pl.BlockSpec((hidden, n_features), const),          # w1T
            pl.BlockSpec((hidden, 1), const),                   # b1T
            pl.BlockSpec((hidden, hidden), const),              # w2T
            pl.BlockSpec((hidden, 1), const),                   # b2T
            pl.BlockSpec((n_outputs, hidden), const),           # w3T
            pl.BlockSpec((n_outputs, 1), const),                # b3T
        ],
        out_specs=pl.BlockSpec((n_outputs, TB), lambda i: (0, i)),
        compiler_params=pltpu.CompilerParams(**cp_kwargs),
        cost_estimate=pl.CostEstimate(
            flops=int(flops),
            transcendentals=int(transcendentals),
            bytes_accessed=int(bytes_accessed),
        ),
    )(xT, kp["w1T"], kp["b1T"], kp["w2T"], kp["b2T"], kp["w3T"], kp["b3T"])


# ---------------------------------------------------------------------------
# Wrapper == TorchModule.forward  (sample-major [..., n_features] in,
# [..., n_outputs].squeeze() out)
# ---------------------------------------------------------------------------
def torch_module_forward(x, kp, *, tb=8192, min_grid_steps=4):
    """Equivalent of TorchModule.forward(x). kp from prepare_kernel_params."""
    # _validate_input
    if x.ndim <= 1:
        raise ValueError(
            f"Expected input dim to be at least 2 ([n_samples, n_features]), "
            f"received: {tuple(x.shape)}"
        )
    n_features = kp["w1T"].shape[1]
    n_outputs = kp["w3T"].shape[0]
    compute_dtype = kp["w1T"].dtype

    batch_shape = x.shape[:-1]
    # Cast to the (narrow) compute dtype BEFORE the transpose/pad layout pass
    # so the wrapper-side HBM traffic is halved in the default bf16 config.
    x2 = jnp.reshape(x, (-1, n_features)).astype(compute_dtype)
    B = x2.shape[0]

    # Batch tile (lane axis): multiple of 128, large by default to amortize the
    # ~0.35 us per-grid-step cost, but capped so big batches still produce
    # >= min_grid_steps steps and both v7x TensorCores get work.
    TB = min(tb, pl.cdiv(B, 128) * 128)
    if B >= min_grid_steps * 128:
        TB = min(TB, max(128, (B // min_grid_steps) // 128 * 128))
    B_pad = pl.cdiv(B, TB) * TB

    # Layout plumbing: batch on the lane axis -> [F, B_pad]. Pad with zeros so
    # every grid step is a full, unmasked tile (garbage columns sliced below).
    xT = x2.T
    if B_pad != B:
        xT = jnp.pad(xT, ((0, 0), (0, B_pad - B)))

    yT = torch_module_forward_feature_major(xT, kp, tb=TB)          # [O, B_pad]

    # Back to [batch..., n_outputs]; _dictionary_to_tensor already corresponds
    # to columns of y, then .squeeze() drops size-1 dims (mirrors torch).
    y = yT[:, :B].T
    y = jnp.reshape(y, batch_shape + (n_outputs,))
    return jnp.squeeze(y)


# ---------------------------------------------------------------------------
# Pure-JAX reference (un-fused, matches the PyTorch evaluation pipeline)
# ---------------------------------------------------------------------------
def reference_forward(x, p):
    xn = (x - p["in_off"]) * p["in_scale"]
    h1 = jnp.tanh(xn @ p["w1"] + p["b1"])
    h2 = jnp.tanh(h1 @ p["w2"] + p["b2"])
    y = h2 @ p["w3"] + p["b3"]
    y = y * p["out_scale"] + p["out_off"]
    return jnp.squeeze(y)


if __name__ == "__main__":
    n_features, hidden, n_outputs = 4, 32, 2
    raw = make_params(n_features=n_features, hidden=hidden, n_outputs=n_outputs)

    # --- 1) f32 compute path: bit-level check of the fused kernel math -----
    kp_f32 = prepare_kernel_params(raw, compute_dtype=jnp.float32)
    x = jax.random.normal(jax.random.PRNGKey(0), (8, n_features), jnp.float32)
    y = jax.block_until_ready(torch_module_forward(x, kp_f32))
    y_ref = reference_forward(x, raw)
    assert y.shape == (8, n_outputs), y.shape
    assert jnp.allclose(y, y_ref, atol=5e-4, rtol=5e-4), (y, y_ref)

    # --- 2) default bf16 compute path: multi-step grid + ragged tail -------
    # tb=256 -> several grid steps for B=300 with a padded last tile.
    kp_bf16 = prepare_kernel_params(raw)  # bf16 MXU operands by default
    x2 = jax.random.normal(jax.random.PRNGKey(1), (300, n_features), jnp.float32)
    y2 = jax.block_until_ready(
        torch_module_forward(x2, kp_bf16, tb=256, min_grid_steps=2))
    y2_ref = reference_forward(x2, raw)
    assert y2.shape == (300, n_outputs), y2.shape
    # bf16 operands (accumulation stays f32) -> looser tolerance than f32 path.
    assert jnp.allclose(y2, y2_ref, atol=5e-2, rtol=5e-2), (
        jnp.max(jnp.abs(y2 - y2_ref)))

    print("KERNEL_OK")
</pallas_src>

<mosaic_0001>
module attributes {stable_mosaic.version = 11 : i64} {
  func.func @torch_module_kernel(%arg0: i32, %arg1: memref<4x128xf32, #tpu.memory_space<vmem>>, %arg2: memref<32x4xf32, #tpu.memory_space<vmem>>, %arg3: memref<32x1xf32, #tpu.memory_space<vmem>>, %arg4: memref<32x32xf32, #tpu.memory_space<vmem>>, %arg5: memref<32x1xf32, #tpu.memory_space<vmem>>, %arg6: memref<2x32xf32, #tpu.memory_space<vmem>>, %arg7: memref<2x1xf32, #tpu.memory_space<vmem>>, %arg8: memref<2x128xf32, #tpu.memory_space<vmem>>) attributes {dimension_semantics = [#tpu.dimension_semantics<parallel>], iteration_bounds = array<i64: 1>, scalar_prefetch = 0 : i64, scratch_operands = 0 : i64, tpu.core_type = #tpu.core_type<tc>, window_params = [{transform_indices = @transform_0, window_bounds = array<i64: 4, 128>}, {pipeline_mode = #tpu.pipeline_mode<synchronous>, transform_indices = @transform_1, window_bounds = array<i64: 32, 4>}, {pipeline_mode = #tpu.pipeline_mode<synchronous>, transform_indices = @transform_2, window_bounds = array<i64: 32, 1>}, {pipeline_mode = #tpu.pipeline_mode<synchronous>, transform_indices = @transform_3, window_bounds = array<i64: 32, 32>}, {pipeline_mode = #tpu.pipeline_mode<synchronous>, transform_indices = @transform_4, window_bounds = array<i64: 32, 1>}, {pipeline_mode = #tpu.pipeline_mode<synchronous>, transform_indices = @transform_5, window_bounds = array<i64: 2, 32>}, {pipeline_mode = #tpu.pipeline_mode<synchronous>, transform_indices = @transform_6, window_bounds = array<i64: 2, 1>}, {transform_indices = @transform_7, window_bounds = array<i64: 2, 128>}]} {
    %c0 = arith.constant 0 : index
    %c0_0 = arith.constant 0 : index
    %0 = vector.load %arg2[%c0, %c0_0] : memref<32x4xf32, #tpu.memory_space<vmem>>, vector<32x4xf32>
    %c0_1 = arith.constant 0 : index
    %c0_2 = arith.constant 0 : index
    %1 = vector.load %arg1[%c0_1, %c0_2] : memref<4x128xf32, #tpu.memory_space<vmem>>, vector<4x128xf32>
    %cst = arith.constant dense<0.000000e+00> : vector<32x128xf32>
    %2 = tpu.matmul %0, %1, %cst {dimension_numbers = #tpu.dot_dimension_numbers<[1], [0], [0], [1], [0, 0, 1, 1], [], []>} : vector<32x4xf32>, vector<4x128xf32>, vector<32x128xf32> -> vector<32x128xf32>
    %c0_3 = arith.constant 0 : index
    %c0_4 = arith.constant 0 : index
    %3 = vector.load %arg3[%c0_3, %c0_4] : memref<32x1xf32, #tpu.memory_space<vmem>>, vector<32x1xf32>
    %4 = vector.broadcast %3 : vector<32x1xf32> to vector<32x128xf32>
    %5 = arith.addf %2, %4 : vector<32x128xf32>
    %6 = math.tanh %5 : vector<32x128xf32>
    %c0_5 = arith.constant 0 : index
    %c0_6 = arith.constant 0 : index
    %7 = vector.load %arg4[%c0_5, %c0_6] : memref<32x32xf32, #tpu.memory_space<vmem>>, vector<32x32xf32>
    %cst_7 = arith.constant dense<0.000000e+00> : vector<32x128xf32>
    %8 = tpu.matmul %7, %6, %cst_7 {dimension_numbers = #tpu.dot_dimension_numbers<[1], [0], [0], [1], [0, 0, 1, 1], [], []>} : vector<32x32xf32>, vector<32x128xf32>, vector<32x128xf32> -> vector<32x128xf32>
    %c0_8 = arith.constant 0 : index
    %c0_9 = arith.constant 0 : index
    %9 = vector.load %arg5[%c0_8, %c0_9] : memref<32x1xf32, #tpu.memory_space<vmem>>, vector<32x1xf32>
    %10 = vector.broadcast %9 : vector<32x1xf32> to vector<32x128xf32>
    %11 = arith.addf %8, %10 : vector<32x128xf32>
    %12 = math.tanh %11 : vector<32x128xf32>
    %c0_10 = arith.constant 0 : index
    %c0_11 = arith.constant 0 : index
    %13 = vector.load %arg6[%c0_10, %c0_11] : memref<2x32xf32, #tpu.memory_space<vmem>>, vector<2x32xf32>
    %cst_12 = arith.constant dense<0.000000e+00> : vector<2x128xf32>
    %14 = tpu.matmul %13, %12, %cst_12 {dimension_numbers = #tpu.dot_dimension_numbers<[1], [0], [0], [1], [0, 0, 1, 1], [], []>} : vector<2x32xf32>, vector<32x128xf32>, vector<2x128xf32> -> vector<2x128xf32>
    %c0_13 = arith.constant 0 : index
    %c0_14 = arith.constant 0 : index
    %15 = vector.load %arg7[%c0_13, %c0_14] : memref<2x1xf32, #tpu.memory_space<vmem>>, vector<2x1xf32>
    %16 = vector.broadcast %15 : vector<2x1xf32> to vector<2x128xf32>
    %17 = arith.addf %14, %16 : vector<2x128xf32>
    %c0_15 = arith.constant 0 : index
    %c0_16 = arith.constant 0 : index
    %18 = vector.load %arg8[%c0_15, %c0_16] : memref<2x128xf32, #tpu.memory_space<vmem>>, vector<2x128xf32>
    tpu.vector_store %arg8[%c0_15, %c0_16], %17 {strides = array<i32>} : memref<2x128xf32, #tpu.memory_space<vmem>>, vector<2x128xf32>,
    return
  }
  func.func @transform_0(%arg0: i32) -> (i32, i32) {
    %c0_i32 = arith.constant 0 : i32
    %c0_i32_0 = arith.constant 0 : i32
    return %c0_i32, %arg0 : i32, i32
  }
  func.func @transform_1(%arg0: i32) -> (i32, i32) {
    %c0_i32 = arith.constant 0 : i32
    %c0_i32_0 = arith.constant 0 : i32
    %c0_i32_1 = arith.constant 0 : i32
    return %c0_i32, %c0_i32_0 : i32, i32
  }
  func.func @transform_2(%arg0: i32) -> (i32, i32) {
    %c0_i32 = arith.constant 0 : i32
    %c0_i32_0 = arith.constant 0 : i32
    %c0_i32_1 = arith.constant 0 : i32
    return %c0_i32, %c0_i32_0 : i32, i32
  }
  func.func @transform_3(%arg0: i32) -> (i32, i32) {
    %c0_i32 = arith.constant 0 : i32
    %c0_i32_0 = arith.constant 0 : i32
    %c0_i32_1 = arith.constant 0 : i32
    return %c0_i32, %c0_i32_0 : i32, i32
  }
  func.func @transform_4(%arg0: i32) -> (i32, i32) {
    %c0_i32 = arith.constant 0 : i32
    %c0_i32_0 = arith.constant 0 : i32
    %c0_i32_1 = arith.constant 0 : i32
    return %c0_i32, %c0_i32_0 : i32, i32
  }
  func.func @transform_5(%arg0: i32) -> (i32, i32) {
    %c0_i32 = arith.constant 0 : i32
    %c0_i32_0 = arith.constant 0 : i32
    %c0_i32_1 = arith.constant 0 : i32
    return %c0_i32, %c0_i32_0 : i32, i32
  }
  func.func @transform_6(%arg0: i32) -> (i32, i32) {
    %c0_i32 = arith.constant 0 : i32
    %c0_i32_0 = arith.constant 0 : i32
    %c0_i32_1 = arith.constant 0 : i32
    return %c0_i32, %c0_i32_0 : i32, i32
  }
  func.func @transform_7(%arg0: i32) -> (i32, i32) {
    %c0_i32 = arith.constant 0 : i32
    %c0_i32_0 = arith.constant 0 : i32
    return %c0_i32, %arg0 : i32, i32
  }
}

</mosaic_0001>

<llo_original>
// kernel: tpu_custom_call.1
$region0: #{tpu_custom_call.1}
  #allocation0 [shape = 'u32[]', space=smem, size = 0x4, offset = 0x4, fixed_abs, tag = 'smem constant byte address 0x4 - core index']
  #allocation1 [shape = 'u32[144,128]{1,0:T(1,128)}', space=vmem, size = 0x12000, scoped, tag = 'internal scratch']
  %s0 = inlined_call_operand.vmem [shape: f32[4,128], index: 0, kind: input, shape index: {}]
  %s1 = inlined_call_operand.vmem [shape: f32[32,4], index: 1, kind: input, shape index: {}]
  %s2 = inlined_call_operand.vmem [shape: f32[32,1], index: 2, kind: input, shape index: {}]
  %s3 = inlined_call_operand.vmem [shape: f32[32,32], index: 3, kind: input, shape index: {}]
  %s4 = inlined_call_operand.vmem [shape: f32[32,1], index: 4, kind: input, shape index: {}]
  %s5 = inlined_call_operand.vmem [shape: f32[2,32], index: 5, kind: input, shape index: {}]
  %s6 = inlined_call_operand.vmem [shape: f32[2,1], index: 6, kind: input, shape index: {}]
  %s7 = inlined_call_operand.hbm [shape: f32[2,128], index: 7, kind: output, shape index: {}]
  %s8 = sld [smem:[#allocation0]]
  $region38: #{tpu_custom_call.1} parent=0
    _
  %s10 = ssub.s32 1, %s8
  %s11 = scalar_select 0, %s10, %s8
  $region1: #{tpu_custom_call.1} parent=0
    #allocation2 [shape = 'u8[1024]{0}', space=vmem, size = 0x400, scoped, tag = 'output window, operand 0, single buffered']
    #allocation3 [shape = 's32[1]{0}', space=sflag, size = 0x4, scoped, tag = 'scoped memory for tpu_custom_call.1']
    %12 = vsyncpa [#allocation3], 0
    // Predicated region
    $region2: #{tpu_custom_call.1} parent=1 // pred_check
      _
    $region3: #{tpu_custom_call.1} parent=1 // pred_check_branch
      %14 = sbr.rel (0) target = $region5
    $region4: #{tpu_custom_call.1} parent=1 // pred_region
      _
    $region5: #{tpu_custom_call.1} parent=1 // pred_fallthru
      _
    // Predicated region
    $region6: #{tpu_custom_call.1} parent=1 // pred_check
      _
    $region7: #{tpu_custom_call.1} parent=1 // pred_check_branch
      %16 = sbr.rel (0) target = $region9
    $region8: #{tpu_custom_call.1} parent=1 // pred_region
      _
    $region9: #{tpu_custom_call.1} parent=1 // pred_fallthru
      _
    // Predicated region
    $region10: #{tpu_custom_call.1} parent=1 // pred_check
      _
    $region11: #{tpu_custom_call.1} parent=1 // pred_check_branch
      %18 = sbr.rel (0) target = $region13
    $region12: #{tpu_custom_call.1} parent=1 // pred_region
      _
    $region13: #{tpu_custom_call.1} parent=1 // pred_fallthru
      _
    // Predicated region
    $region14: #{tpu_custom_call.1} parent=1 // pred_check
      _
    $region15: #{tpu_custom_call.1} parent=1 // pred_check_branch
      %20 = sbr.rel (0) target = $region17
    $region16: #{tpu_custom_call.1} parent=1 // pred_region
      _
    $region17: #{tpu_custom_call.1} parent=1 // pred_fallthru
      _
    // Predicated region
    $region18: #{tpu_custom_call.1} parent=1 // pred_check
      _
    $region19: #{tpu_custom_call.1} parent=1 // pred_check_branch
      %22 = sbr.rel (0) target = $region21
    $region20: #{tpu_custom_call.1} parent=1 // pred_region
      _
    $region21: #{tpu_custom_call.1} parent=1 // pred_fallthru
      _
    // Predicated region
    $region22: #{tpu_custom_call.1} parent=1 // pred_check
      _
    $region23: #{tpu_custom_call.1} parent=1 // pred_check_branch
      %24 = sbr.rel (0) target = $region25
    $region24: #{tpu_custom_call.1} parent=1 // pred_region
      _
    $region25: #{tpu_custom_call.1} parent=1 // pred_fallthru
      _
    // Predicated region
    $region26: #{tpu_custom_call.1} parent=1 // pred_check
      _
    $region27: #{tpu_custom_call.1} parent=1 // pred_check_branch
      %26 = sbr.rel (0) target = $region29
    $region28: #{tpu_custom_call.1} parent=1 // pred_region
      _
    $region29: #{tpu_custom_call.1} parent=1 // pred_fallthru
      _
    %v27 = vld [vmem:[%s1] sm:$0xff]
    %v28 = vld [vmem:[%s1 + $0x8] sm:$0xff]
    %v29 = vld [vmem:[%s1 + $0x10] sm:$0xff]
    %v30 = vld [vmem:[%s1 + $0x18] sm:$0xff]
    %v31 = vld [vmem:[%s0] sm:$0xf]
    %v32 = vld [vmem:[%s2] sm:$0xff]
    %v33 = vld [vmem:[%s2 + $0x8] sm:$0xff]
    %v34 = vld [vmem:[%s2 + $0x10] sm:$0xff]
    %v35 = vld [vmem:[%s2 + $0x18] sm:$0xff]
    %37 = vset.pattern.permute.xlu0 0
    %38 = vperm.xlu0 %37, %v32
    %v39 = vpop.permute.xlu0 %38
    %42 = vset.pattern.permute.xlu0 0
    %43 = vperm.xlu0 %42, %v33
    %v44 = vpop.permute.xlu0 %43
    %47 = vset.pattern.permute.xlu0 0
    %48 = vperm.xlu0 %47, %v34
    %v49 = vpop.permute.xlu0 %48
    %52 = vset.pattern.permute.xlu0 0
    %53 = vperm.xlu0 %52, %v35
    %v54 = vpop.permute.xlu0 %53
    %vm56 = vcmask 31744
    %v58 = vsel %vm56, %v27, 0
    %v61 = vsel %vm56, %v28, 0
    %v64 = vsel %vm56, %v29, 0
    %v67 = vsel %vm56, %v30, 0
    %vm69 = vcmask 1043456
    %v71 = vsel %vm69, %v31, 0
    %73 = vmatprep.subr.mxu0 0.0
    %74 = vmatpush1.msra.mxu0 %v71
    %75 = vmatprep.subr.mxu0 0.0
    %76 = vmatpush1.msra.mxu0 0.0
    %77 = vmatprep.subr.mxu0 0.0
    %78 = vmatpush1.msra.mxu0 0.0
    %79 = vmatprep.subr.mxu0 0.0
    %80 = vmatpush1.msra.mxu0 0.0
    %81 = vmatprep.subr.mxu0 0.0
    %82 = vmatpush1.msra.mxu0 0.0
    %83 = vmatprep.subr.mxu0 0.0
    %84 = vmatpush1.msra.mxu0 0.0
    %85 = vmatprep.subr.mxu0 0.0
    %86 = vmatpush1.msra.mxu0 0.0
    %87 = vmatprep.subr.mxu0 0.0
    %88 = vmatpush1.msra.mxu0 0.0
    %89 = vmatprep.subr.mxu0 0.0
    %90 = vmatpush1.msra.mxu0 0.0
    %91 = vmatprep.subr.mxu0 0.0
    %92 = vmatpush1.msra.mxu0 0.0
    %93 = vmatprep.subr.mxu0 0.0
    %94 = vmatpush1.msra.mxu0 0.0
    %95 = vmatprep.subr.mxu0 0.0
    %96 = vmatpush1.msra.mxu0 0.0
    %97 = vmatprep.subr.mxu0 0.0
    %98 = vmatpush1.msra.mxu0 0.0
    %99 = vmatprep.subr.mxu0 0.0
    %100 = vmatpush1.msra.mxu0 0.0
    %101 = vmatprep.subr.mxu0 0.0
    %102 = vmatpush1.msra.mxu0 0.0
    %103 = vmatprep.subr.mxu0 0.0
    %104 = vmatpush1.msra.mxu0 0.0
    %105 = vmatprep.subr.mxu0 0.0
    %106 = vmatpush1.msra.mxu0 0.0
    %107 = vmatprep.subr.mxu0 0.0
    %108 = vmatpush1.msra.mxu0 0.0
    %109 = vmatprep.subr.mxu0 0.0
    %110 = vmatpush1.msra.mxu0 0.0
    %111 = vmatprep.subr.mxu0 0.0
    %112 = vmatpush1.msra.mxu0 0.0
    %113 = vmatprep.subr.mxu0 0.0
    %114 = vmatpush1.msra.mxu0 0.0
    %115 = vmatprep.subr.mxu0 0.0
    %116 = vmatpush1.msra.mxu0 0.0
    %117 = vmatprep.subr.mxu0 0.0
    %118 = vmatpush1.msra.mxu0 0.0
    %119 = vmatprep.subr.mxu0 0.0
    %120 = vmatpush1.msra.mxu0 0.0
    %121 = vmatprep.subr.mxu0 0.0
    %122 = vmatpush1.msra.mxu0 0.0
    %123 = vmatprep.subr.mxu0 0.0
    %124 = vmatpush1.msra.mxu0 0.0
    %125 = vmatprep.subr.mxu0 0.0
    %126 = vmatpush1.msra.mxu0 0.0
    %127 = vmatprep.subr.mxu0 0.0
    %128 = vmatpush1.msra.mxu0 0.0
    %129 = vmatprep.subr.mxu0 0.0
    %130 = vmatpush1.msra.mxu0 0.0
    %131 = vmatprep.subr.mxu0 0.0
    %132 = vmatpush1.msra.mxu0 0.0
    %133 = vmatprep.subr.mxu0 0.0
    %134 = vmatpush1.msra.mxu0 0.0
    %135 = vmatprep.subr.mxu0 0.0
    %136 = vmatpush1.msra.mxu0 0.0
    %137 = vmatprep.mubr.f32.mxu0 0.0
    %138 = vmatmul.mubr.f32.gmra.mrb[0].mxu0 %v58
    %v139 = vpop.f32.mrb[0].mxu0
    %v140 = vadd.f32 %v39, %v139
    %v141 = vpop.f32.mrb[0].mxu0
    %142 = vmatprep.mubr.f32.mxu0 0.0
    %143 = vmatmul.mubr.f32.gmra.mrb[0].mxu0 %v61
    %v144 = vpop.f32.mrb[0].mxu0
    %v145 = vadd.f32 %v44, %v144
    %v146 = vpop.f32.mrb[0].mxu0
    %147 = vmatprep.mubr.f32.mxu0 0.0
    %148 = vmatmul.mubr.f32.gmra.mrb[0].mxu0 %v64
    %v149 = vpop.f32.mrb[0].mxu0
    %v150 = vadd.f32 %v49, %v149
    %v151 = vpop.f32.mrb[0].mxu0
    %152 = vmatprep.mubr.f32.mxu0 0.0
    %153 = vmatmul.mubr.f32.gmra.mrb[0].mxu0 %v67
    %v154 = vpop.f32.mrb[0].mxu0
    %v155 = vadd.f32 %v54, %v154
    %v156 = vpop.f32.mrb[0].mxu0
    %157 = vdwg.mxu0
    %v158 = vtanh.pop %v140
    %v159 = vtanh.pop %v145
    %v160 = vtanh.pop %v150
    %v161 = vtanh.pop %v155
    %v162 = vld [vmem:[%s3] sm:$0xff]
    %v163 = vld [vmem:[%s3 + $0x8] sm:$0xff]
    %v164 = vld [vmem:[%s3 + $0x10] sm:$0xff]
    %v165 = vld [vmem:[%s3 + $0x18] sm:$0xff]
    %v166 = vld [vmem:[%s4] sm:$0xff]
    %v167 = vld [vmem:[%s4 + $0x8] sm:$0xff]
    %v168 = vld [vmem:[%s4 + $0x10] sm:$0xff]
    %v169 = vld [vmem:[%s4 + $0x18] sm:$0xff]
    %171 = vset.pattern.permute.xlu0 0
    %172 = vperm.xlu0 %171, %v166
    %v173 = vpop.permute.xlu0 %172
    %176 = vset.pattern.permute.xlu0 0
    %177 = vperm.xlu0 %176, %v167
    %v178 = vpop.permute.xlu0 %177
    %181 = vset.pattern.permute.xlu0 0
    %182 = vperm.xlu0 %181, %v168
    %v183 = vpop.permute.xlu0 %182
    %186 = vset.pattern.permute.xlu0 0
    %187 = vperm.xlu0 %186, %v169
    %v188 = vpop.permute.xlu0 %187
    %vm190 = vcmask 261120
    %v192 = vsel %vm190, %v162, 0
    %v195 = vsel %vm190, %v163, 0
    %v198 = vsel %vm190, %v164, 0
    %v201 = vsel %vm190, %v165, 0
    %203 = vmatprep.subr.mxu0 0.0
    %204 = vmatpush1.msra.mxu0 %v158
    %205 = vmatprep.subr.mxu0 0.0
    %206 = vmatpush1.msra.mxu0 %v159
    %207 = vmatprep.subr.mxu0 0.0
    %208 = vmatpush1.msra.mxu0 %v160
    %209 = vmatprep.subr.mxu0 0.0
    %210 = vmatpush1.msra.mxu0 %v161
    %211 = vmatprep.subr.mxu0 0.0
    %212 = vmatpush1.msra.mxu0 0.0
    %213 = vmatprep.subr.mxu0 0.0
    %214 = vmatpush1.msra.mxu0 0.0
    %215 = vmatprep.subr.mxu0 0.0
    %216 = vmatpush1.msra.mxu0 0.0
    %217 = vmatprep.subr.mxu0 0.0
    %218 = vmatpush1.msra.mxu0 0.0
    %219 = vmatprep.subr.mxu0 0.0
    %220 = vmatpush1.msra.mxu0 0.0
    %221 = vmatprep.subr.mxu0 0.0
    %222 = vmatpush1.msra.mxu0 0.0
    %223 = vmatprep.subr.mxu0 0.0
    %224 = vmatpush1.msra.mxu0 0.0
    %225 = vmatprep.subr.mxu0 0.0
    %226 = vmatpush1.msra.mxu0 0.0
    %227 = vmatprep.subr.mxu0 0.0
    %228 = vmatpush1.msra.mxu0 0.0
    %229 = vmatprep.subr.mxu0 0.0
    %230 = vmatpush1.msra.mxu0 0.0
    %231 = vmatprep.subr.mxu0 0.0
    %232 = vmatpush1.msra.mxu0 0.0
    %233 = vmatprep.subr.mxu0 0.0
    %234 = vmatpush1.msra.mxu0 0.0
    %235 = vmatprep.subr.mxu0 0.0
    %236 = vmatpush1.msra.mxu0 0.0
    %237 = vmatprep.subr.mxu0 0.0
    %238 = vmatpush1.msra.mxu0 0.0
    %239 = vmatprep.subr.mxu0 0.0
    %240 = vmatpush1.msra.mxu0 0.0
    %241 = vmatprep.subr.mxu0 0.0
    %242 = vmatpush1.msra.mxu0 0.0
    %243 = vmatprep.subr.mxu0 0.0
    %244 = vmatpush1.msra.mxu0 0.0
    %245 = vmatprep.subr.mxu0 0.0
    %246 = vmatpush1.msra.mxu0 0.0
    %247 = vmatprep.subr.mxu0 0.0
    %248 = vmatpush1.msra.mxu0 0.0
    %249 = vmatprep.subr.mxu0 0.0
    %250 = vmatpush1.msra.mxu0 0.0
    %251 = vmatprep.subr.mxu0 0.0
    %252 = vmatpush1.msra.mxu0 0.0
    %253 = vmatprep.subr.mxu0 0.0
    %254 = vmatpush1.msra.mxu0 0.0
    %255 = vmatprep.subr.mxu0 0.0
    %256 = vmatpush1.msra.mxu0 0.0
    %257 = vmatprep.subr.mxu0 0.0
    %258 = vmatpush1.msra.mxu0 0.0
    %259 = vmatprep.subr.mxu0 0.0
    %260 = vmatpush1.msra.mxu0 0.0
    %261 = vmatprep.subr.mxu0 0.0
    %262 = vmatpush1.msra.mxu0 0.0
    %263 = vmatprep.subr.mxu0 0.0
    %264 = vmatpush1.msra.mxu0 0.0
    %265 = vmatprep.subr.mxu0 0.0
    %266 = vmatpush1.msra.mxu0 0.0
    %267 = vmatprep.mubr.f32.mxu0 0.0
    %268 = vmatmul.mubr.f32.gmra.mrb[0].mxu0 %v192
    %v269 = vpop.f32.mrb[0].mxu0
    %v270 = vadd.f32 %v173, %v269
    %v271 = vpop.f32.mrb[0].mxu0
    %272 = vmatprep.mubr.f32.mxu0 0.0
    %273 = vmatmul.mubr.f32.gmra.mrb[0].mxu0 %v195
    %v274 = vpop.f32.mrb[0].mxu0
    %v275 = vadd.f32 %v178, %v274
    %v276 = vpop.f32.mrb[0].mxu0
    %277 = vmatprep.mubr.f32.mxu0 0.0
    %278 = vmatmul.mubr.f32.gmra.mrb[0].mxu0 %v198
    %v279 = vpop.f32.mrb[0].mxu0
    %v280 = vadd.f32 %v183, %v279
    %v281 = vpop.f32.mrb[0].mxu0
    %282 = vmatprep.mubr.f32.mxu0 0.0
    %283 = vmatmul.mubr.f32.gmra.mrb[0].mxu0 %v201
    %v284 = vpop.f32.mrb[0].mxu0
    %v285 = vadd.f32 %v188, %v284
    %v286 = vpop.f32.mrb[0].mxu0
    %287 = vdwg.mxu0
    %v288 = vtanh.pop %v270
    %v289 = vtanh.pop %v275
    %v290 = vtanh.pop %v280
    %v291 = vtanh.pop %v285
    %v292 = vld [vmem:[%s5] sm:$0x3]
    %v293 = vld [vmem:[%s6] sm:$0x3]
    %295 = vset.pattern.permute.xlu0 0
    %296 = vperm.xlu0 %295, %v293
    %v297 = vpop.permute.xlu0 %296
    %v300 = vsel %vm190, %v292, 0
    %302 = vmatprep.subr.mxu0 0.0
    %303 = vmatpush1.msra.mxu0 %v288
    %304 = vmatprep.subr.mxu0 0.0
    %305 = vmatpush1.msra.mxu0 %v289
    %306 = vmatprep.subr.mxu0 0.0
    %307 = vmatpush1.msra.mxu0 %v290
    %308 = vmatprep.subr.mxu0 0.0
    %309 = vmatpush1.msra.mxu0 %v291
    %310 = vmatprep.subr.mxu0 0.0
    %311 = vmatpush1.msra.mxu0 0.0
    %312 = vmatprep.subr.mxu0 0.0
    %313 = vmatpush1.msra.mxu0 0.0
    %314 = vmatprep.subr.mxu0 0.0
    %315 = vmatpush1.msra.mxu0 0.0
    %316 = vmatprep.subr.mxu0 0.0
    %317 = vmatpush1.msra.mxu0 0.0
    %318 = vmatprep.subr.mxu0 0.0
    %319 = vmatpush1.msra.mxu0 0.0
    %320 = vmatprep.subr.mxu0 0.0
    %321 = vmatpush1.msra.mxu0 0.0
    %322 = vmatprep.subr.mxu0 0.0
    %323 = vmatpush1.msra.mxu0 0.0
    %324 = vmatprep.subr.mxu0 0.0
    %325 = vmatpush1.msra.mxu0 0.0
    %326 = vmatprep.subr.mxu0 0.0
    %327 = vmatpush1.msra.mxu0 0.0
    %328 = vmatprep.subr.mxu0 0.0
    %329 = vmatpush1.msra.mxu0 0.0
    %330 = vmatprep.subr.mxu0 0.0
    %331 = vmatpush1.msra.mxu0 0.0
    %332 = vmatprep.subr.mxu0 0.0
    %333 = vmatpush1.msra.mxu0 0.0
    %334 = vmatprep.subr.mxu0 0.0
    %335 = vmatpush1.msra.mxu0 0.0
    %336 = vmatprep.subr.mxu0 0.0
    %337 = vmatpush1.msra.mxu0 0.0
    %338 = vmatprep.subr.mxu0 0.0
    %339 = vmatpush1.msra.mxu0 0.0
    %340 = vmatprep.subr.mxu0 0.0
    %341 = vmatpush1.msra.mxu0 0.0
    %342 = vmatprep.subr.mxu0 0.0
    %343 = vmatpush1.msra.mxu0 0.0
    %344 = vmatprep.subr.mxu0 0.0
    %345 = vmatpush1.msra.mxu0 0.0
    %346 = vmatprep.subr.mxu0 0.0
    %347 = vmatpush1.msra.mxu0 0.0
    %348 = vmatprep.subr.mxu0 0.0
    %349 = vmatpush1.msra.mxu0 0.0
    %350 = vmatprep.subr.mxu0 0.0
    %351 = vmatpush1.msra.mxu0 0.0
    %352 = vmatprep.subr.mxu0 0.0
    %353 = vmatpush1.msra.mxu0 0.0
    %354 = vmatprep.subr.mxu0 0.0
    %355 = vmatpush1.msra.mxu0 0.0
    %356 = vmatprep.subr.mxu0 0.0
    %357 = vmatpush1.msra.mxu0 0.0
    %358 = vmatprep.subr.mxu0 0.0
    %359 = vmatpush1.msra.mxu0 0.0
    %360 = vmatprep.subr.mxu0 0.0
    %361 = vmatpush1.msra.mxu0 0.0
    %362 = vmatprep.subr.mxu0 0.0
    %363 = vmatpush1.msra.mxu0 0.0
    %364 = vmatprep.subr.mxu0 0.0
    %365 = vmatpush1.msra.mxu0 0.0
    %366 = vmatprep.mubr.f32.mxu0 0.0
    %367 = vmatmul.mubr.f32.gmra.mrb[0].mxu0 %v300
    %v368 = vpop.f32.mrb[0].mxu0
    %v369 = vadd.f32 %v297, %v368
    %v370 = vpop.f32.mrb[0].mxu0
    %371 = vdwg.mxu0
    %372 = vst [vmem:[#allocation2] sm:$0x3] %v369
    // Predicated region
    $region30: #{tpu_custom_call.1} parent=1 // pred_check
      _
    $region31: #{tpu_custom_call.1} parent=1 // pred_check_branch
      %374 = sbr.rel (0) target = $region33
    $region32: #{tpu_custom_call.1} parent=1 // pred_region
      %s376 = ssub.s32 32, 32
      %377 = vsyncadd [#allocation3], %s376
      %s379 = sshll.u32 [#allocation2], 4
      %s380 = int_to_ptr.vmem [resolvable:$true] %s379
      %382 = dma.vmem_to_hbm [thread:$0]  %s380, 32, %s7, [#allocation3]
    $region33: #{tpu_custom_call.1} parent=1 // pred_fallthru
      _
    // Predicated region
    $region34: #{tpu_custom_call.1} parent=1 // pred_check
      _
    $region35: #{tpu_custom_call.1} parent=1 // pred_check_branch
      %384 = sbr.rel (0) target = $region37
    $region36: #{tpu_custom_call.1} parent=1 // pred_region
      %385 = dma.done [#allocation3], 32
    $region37: #{tpu_custom_call.1} parent=1 // pred_fallthru
      _
    %386 = vsyncpa [#allocation3], 1

</llo_original>
